<compile_context>
chip_gen: v7x
topology: tpu7x:2x2x1
jax: 0.10.0
libtpu: 0.0.40
codegen_flags: <defaults>
</compile_context>

<pallas_src>
import functools
import math

import jax
import jax.numpy as jnp
from jax import lax
from jax.experimental import pallas as pl
from jax.experimental.pallas import tpu as pltpu


def _round_up(n, k):
    return ((n + k - 1) // k) * k


def _add_margin_kernel(x_ref, wn_ref, lbl_ref, loss_ref, corr_ref,
                       xn_ref, cmax_ref, ssum_ref, clbl_ref,
                       *, m, s, c_actual, tb, tc):
    ci = pl.program_id(1)
    nct = pl.num_programs(1)

    # --- init on the first class tile of this batch tile: normalize x once,
    # cache it as bf16, reset the online-LSE / running-max state.
    @pl.when(ci == 0)
    def _init():
        x = x_ref[...].astype(jnp.float32)                       # (TB, D)
        ssq = jnp.sum(x * x, axis=-1, keepdims=True)
        inv = lax.rsqrt(jnp.maximum(ssq, 1e-24))                 # F.normalize eps=1e-12
        xn_ref[...] = (x * inv).astype(jnp.bfloat16)
        cmax_ref[...] = jnp.full((tb, 1), -1e30, jnp.float32)
        ssum_ref[...] = jnp.zeros((tb, 1), jnp.float32)
        clbl_ref[...] = jnp.zeros((tb, 1), jnp.float32)

    # --- cosine tile: bf16 operands, f32 accumulation, contract last dims of
    # both operands directly (no transpose of the weight tile).
    cosine = lax.dot_general(
        xn_ref[...], wn_ref[...],
        dimension_numbers=(((1,), (1,)), ((), ())),
        preferred_element_type=jnp.float32)                      # (TB, TC)

    # mask padded (out-of-range) classes
    class_id = ci * tc + lax.broadcasted_iota(jnp.int32, (tb, tc), 1)
    cosine = jnp.where(class_id < c_actual, cosine, -1e30)

    lbl = lbl_ref[...]                                           # (TB, 1) int32
    one_hot = (class_id == lbl).astype(jnp.float32)

    # logits = (one_hot*phi + (1-one_hot)*cosine) * s  ==  s*cos - (s*m)*one_hot
    logits = s * cosine - (s * m) * one_hot

    # --- online log-sum-exp with shift M = s * running_cos_max
    # (valid since logits <= s*cosine elementwise, m > 0).
    tile_cmax = jnp.max(cosine, axis=-1, keepdims=True)
    old_cmax = cmax_ref[...]
    new_cmax = jnp.maximum(old_cmax, tile_cmax)
    rescale = jnp.exp(s * (old_cmax - new_cmax))
    ssum_ref[...] = (ssum_ref[...] * rescale
                     + jnp.sum(jnp.exp(logits - s * new_cmax),
                               axis=-1, keepdims=True))
    cmax_ref[...] = new_cmax
    # cosine at the label class (nonzero in exactly one class tile)
    clbl_ref[...] = clbl_ref[...] + jnp.sum(cosine * one_hot,
                                            axis=-1, keepdims=True)

    # --- finalize on the last class tile: per-row loss & correct flag.
    @pl.when(ci == nct - 1)
    def _fin():
        cmax = cmax_ref[...]
        lse = s * cmax + jnp.log(ssum_ref[...])                  # (TB, 1)
        clbl = clbl_ref[...]
        # -log softmax at the label: lse - logits[label], logits[label] = s*(cos_lbl - m)
        loss_ref[...] = lse - s * (clbl - m)
        # argmax(phi) == argmax(cosine) (uniform -m shift): correct iff the
        # label's cosine attains the running max.
        corr_ref[...] = (clbl >= cmax).astype(jnp.float32)


def add_margin_product(x, weight, label, m=0.4, s=30.0, tb=None, tc=None):
    """Returns (mean cross-entropy loss, accuracy %) of the CosFace head."""
    B, D = x.shape
    C, _ = weight.shape

    # lane/sublane-friendly tile sizes (capped for small problems)
    TB = int(tb) if tb is not None else min(128, _round_up(B, 8))
    TC = int(tc) if tc is not None else min(512, _round_up(C, 128))
    D_pad = _round_up(D, 128)
    B_pad = _round_up(B, TB)
    C_pad = _round_up(C, TC)
    nbt, nct = B_pad // TB, C_pad // TC

    # Weight normalization hoisted out of the (batch x class) grid: done once
    # here in f32, then cast to bf16 for the MXU.
    w = weight.astype(jnp.float32)
    w_n = (w * lax.rsqrt(
        jnp.maximum(jnp.sum(w * w, axis=-1, keepdims=True), 1e-24))
           ).astype(jnp.bfloat16)

    x_p = jnp.pad(x.astype(jnp.float32), ((0, B_pad - B), (0, D_pad - D)))
    w_p = jnp.pad(w_n, ((0, C_pad - C), (0, D_pad - D)))
    lbl_p = jnp.pad(label.astype(jnp.int32).reshape(-1, 1),
                    ((0, B_pad - B), (0, 0)))

    kernel = functools.partial(_add_margin_kernel, m=float(m), s=float(s),
                               c_actual=C, tb=TB, tc=TC)

    loss_rows, corr_rows = pl.pallas_call(
        kernel,
        out_shape=(
            jax.ShapeDtypeStruct((B_pad, 1), jnp.float32),
            jax.ShapeDtypeStruct((B_pad, 1), jnp.float32),
        ),
        grid_spec=pltpu.PrefetchScalarGridSpec(
            num_scalar_prefetch=0,
            grid=(nbt, nct),
            in_specs=[
                pl.BlockSpec((TB, D_pad), lambda bi, ci: (bi, 0)),   # x (f32)
                pl.BlockSpec((TC, D_pad), lambda bi, ci: (ci, 0)),   # w_norm (bf16)
                pl.BlockSpec((TB, 1), lambda bi, ci: (bi, 0)),       # labels (int32)
            ],
            out_specs=[
                pl.BlockSpec((TB, 1), lambda bi, ci: (bi, 0)),       # per-row loss
                pl.BlockSpec((TB, 1), lambda bi, ci: (bi, 0)),       # per-row correct
            ],
            scratch_shapes=[
                pltpu.VMEM((TB, D_pad), jnp.bfloat16),   # cached normalized x
                pltpu.VMEM((TB, 1), jnp.float32),        # running cosine max
                pltpu.VMEM((TB, 1), jnp.float32),        # running exp-sum
                pltpu.VMEM((TB, 1), jnp.float32),        # cosine at label
            ]),
        compiler_params=pltpu.CompilerParams(
            dimension_semantics=("parallel", "arbitrary"),
            vmem_limit_bytes=32 * 1024 * 1024),
    )(x_p, w_p, lbl_p)

    loss = jnp.sum(loss_rows[:B, 0]) / B
    acc = jnp.sum(corr_rows[:B, 0]) / B * 100.0
    return loss, acc


def _reference(x, weight, label, m, s):
    """Pure-JAX reference mirroring the kernel's bf16 MXU operands."""
    x = x.astype(jnp.float32)
    w = weight.astype(jnp.float32)
    xn = x * lax.rsqrt(jnp.maximum(jnp.sum(x * x, -1, keepdims=True), 1e-24))
    wn = w * lax.rsqrt(jnp.maximum(jnp.sum(w * w, -1, keepdims=True), 1e-24))
    cosine = jnp.dot(xn.astype(jnp.bfloat16).astype(jnp.float32),
                     wn.astype(jnp.bfloat16).astype(jnp.float32).T)
    phi = cosine - m
    one_hot = jax.nn.one_hot(label, w.shape[0], dtype=jnp.float32)
    logits = s * (one_hot * phi + (1.0 - one_hot) * cosine)
    logp = jax.nn.log_softmax(logits, axis=-1)
    loss = -jnp.mean(jnp.sum(one_hot * logp, axis=-1))
    acc = jnp.mean((jnp.argmax(phi, -1) == label).astype(jnp.float32)) * 100.0
    return loss, acc


if __name__ == "__main__":
    key = jax.random.PRNGKey(0)
    B, in_features, out_features = 12, 40, 200   # exercises B/C/D padding and
                                                 # multi-tile online LSE
    kx, kw, kl = jax.random.split(key, 3)
    x = jax.random.normal(kx, (B, in_features), dtype=jnp.float32)

    # xavier_uniform_ init for weight (out_features, in_features)
    bound = math.sqrt(6.0 / (in_features + out_features))
    weight = jax.random.uniform(kw, (out_features, in_features),
                                dtype=jnp.float32, minval=-bound, maxval=bound)
    label = jax.random.randint(kl, (B,), 0, out_features, dtype=jnp.int32)

    loss, acc = add_margin_product(x, weight, label, m=0.4, s=30.0,
                                   tb=8, tc=128)   # small tiles -> 2x2 grid
    jax.block_until_ready((loss, acc))

    loss_ref, acc_ref = _reference(x, weight, label, 0.4, 30.0)
    assert abs(float(loss) - float(loss_ref)) < 5e-2, (float(loss), float(loss_ref))
    assert abs(float(acc) - float(acc_ref)) <= 100.0 / B + 1e-3, (float(acc), float(acc_ref))

    print("KERNEL_OK")
</pallas_src>

<mosaic_0001>
module attributes {stable_mosaic.version = 11 : i64} {
  func.func @_add_margin_kernel(%arg0: i32, %arg1: i32, %arg2: memref<8x128xf32, #tpu.memory_space<vmem>>, %arg3: memref<128x128xbf16, #tpu.memory_space<vmem>>, %arg4: memref<8x1xi32, #tpu.memory_space<vmem>>, %arg5: memref<8x1xf32, #tpu.memory_space<vmem>>, %arg6: memref<8x1xf32, #tpu.memory_space<vmem>>, %arg7: memref<8x128xbf16, #tpu.memory_space<vmem>>, %arg8: memref<8x1xf32, #tpu.memory_space<vmem>>, %arg9: memref<8x1xf32, #tpu.memory_space<vmem>>, %arg10: memref<8x1xf32, #tpu.memory_space<vmem>>) attributes {dimension_semantics = [#tpu.dimension_semantics<parallel>, #tpu.dimension_semantics<arbitrary>], iteration_bounds = array<i64: 2, 2>, scalar_prefetch = 0 : i64, scratch_operands = 4 : i64, tpu.core_type = #tpu.core_type<tc>, window_params = [{transform_indices = @transform_0, window_bounds = array<i64: 8, 128>}, {transform_indices = @transform_1, window_bounds = array<i64: 128, 128>}, {transform_indices = @transform_2, window_bounds = array<i64: 8, 1>}, {transform_indices = @transform_3, window_bounds = array<i64: 8, 1>}, {transform_indices = @transform_4, window_bounds = array<i64: 8, 1>}]} {
    %c0_i32 = arith.constant 0 : i32
    %0 = arith.cmpi eq, %arg1, %c0_i32 : i32
    %1 = arith.extui %0 : i1 to i32
    %c0_i32_0 = arith.constant 0 : i32
    %2 = arith.cmpi ne, %1, %c0_i32_0 : i32
    scf.if %2 {
      %c0_27 = arith.constant 0 : index
      %c0_28 = arith.constant 0 : index
      %53 = vector.load %arg2[%c0_27, %c0_28] : memref<8x128xf32, #tpu.memory_space<vmem>>, vector<8x128xf32>
      %54 = arith.mulf %53, %53 : vector<8x128xf32>
      %cst_29 = arith.constant dense<0.000000e+00> : vector<8xf32>
      %55 = vector.multi_reduction <add>, %54, %cst_29 [1] : vector<8x128xf32> to vector<8xf32>
      %56 = vector.shape_cast %55 : vector<8xf32> to vector<8x1xf32>
      %cst_30 = arith.constant 1.000000e-24 : f32
      %57 = vector.broadcast %cst_30 : f32 to vector<8x1xf32>
      %58 = arith.maximumf %56, %57 : vector<8x1xf32>
      %59 = math.rsqrt %58 : vector<8x1xf32>
      %60 = vector.broadcast %59 : vector<8x1xf32> to vector<8x128xf32>
      %61 = arith.mulf %53, %60 : vector<8x128xf32>
      %62 = arith.truncf %61 : vector<8x128xf32> to vector<8x128xbf16>
      %c0_31 = arith.constant 0 : index
      %c0_32 = arith.constant 0 : index
      %63 = vector.load %arg7[%c0_31, %c0_32] : memref<8x128xbf16, #tpu.memory_space<vmem>>, vector<8x128xbf16>
      tpu.vector_store %arg7[%c0_31, %c0_32], %62 {strides = array<i32>} : memref<8x128xbf16, #tpu.memory_space<vmem>>, vector<8x128xbf16>,
      %cst_33 = arith.constant -1.000000e+30 : f32
      %64 = vector.broadcast %cst_33 : f32 to vector<8x1xf32>
      %c0_34 = arith.constant 0 : index
      %c0_35 = arith.constant 0 : index
      %65 = vector.load %arg8[%c0_34, %c0_35] : memref<8x1xf32, #tpu.memory_space<vmem>>, vector<8x1xf32>
      tpu.vector_store %arg8[%c0_34, %c0_35], %64 {strides = array<i32>} : memref<8x1xf32, #tpu.memory_space<vmem>>, vector<8x1xf32>,
      %cst_36 = arith.constant 0.000000e+00 : f32
      %66 = vector.broadcast %cst_36 : f32 to vector<8x1xf32>
      %c0_37 = arith.constant 0 : index
      %c0_38 = arith.constant 0 : index
      %67 = vector.load %arg9[%c0_37, %c0_38] : memref<8x1xf32, #tpu.memory_space<vmem>>, vector<8x1xf32>
      tpu.vector_store %arg9[%c0_37, %c0_38], %66 {strides = array<i32>} : memref<8x1xf32, #tpu.memory_space<vmem>>, vector<8x1xf32>,
      %cst_39 = arith.constant 0.000000e+00 : f32
      %68 = vector.broadcast %cst_39 : f32 to vector<8x1xf32>
      %c0_40 = arith.constant 0 : index
      %c0_41 = arith.constant 0 : index
      %69 = vector.load %arg10[%c0_40, %c0_41] : memref<8x1xf32, #tpu.memory_space<vmem>>, vector<8x1xf32>
      tpu.vector_store %arg10[%c0_40, %c0_41], %68 {strides = array<i32>} : memref<8x1xf32, #tpu.memory_space<vmem>>, vector<8x1xf32>,
    } else {
    }
    %c0 = arith.constant 0 : index
    %c0_1 = arith.constant 0 : index
    %3 = vector.load %arg7[%c0, %c0_1] : memref<8x128xbf16, #tpu.memory_space<vmem>>, vector<8x128xbf16>
    %c0_2 = arith.constant 0 : index
    %c0_3 = arith.constant 0 : index
    %4 = vector.load %arg3[%c0_2, %c0_3] : memref<128x128xbf16, #tpu.memory_space<vmem>>, vector<128x128xbf16>
    %cst = arith.constant dense<0.000000e+00> : vector<8x128xf32>
    %5 = tpu.matmul %3, %4, %cst {dimension_numbers = #tpu.dot_dimension_numbers<[1], [1], [0], [0], [0, 0, 1, 0], [], []>} : vector<8x128xbf16>, vector<128x128xbf16>, vector<8x128xf32> -> vector<8x128xf32>
    %c128_i32 = arith.constant 128 : i32
    %6 = arith.muli %arg1, %c128_i32 : i32
    %7 = tpu.iota {dimensions = array<i32: 1>} : vector<8x128xi32>
    %8 = vector.broadcast %6 : i32 to vector<8x128xi32>
    %9 = arith.addi %8, %7 : vector<8x128xi32>
    %c200_i32 = arith.constant 200 : i32
    %10 = vector.broadcast %c200_i32 : i32 to vector<8x128xi32>
    %11 = arith.cmpi slt, %9, %10 : vector<8x128xi32>
    %cst_4 = arith.constant -1.000000e+30 : f32
    %12 = vector.broadcast %cst_4 : f32 to vector<8x128xf32>
    %13 = arith.select %11, %5, %12 : vector<8x128xi1>, vector<8x128xf32>
    %c0_5 = arith.constant 0 : index
    %c0_6 = arith.constant 0 : index
    %14 = vector.load %arg4[%c0_5, %c0_6] : memref<8x1xi32, #tpu.memory_space<vmem>>, vector<8x1xi32>
    %15 = vector.broadcast %14 : vector<8x1xi32> to vector<8x128xi32>
    %16 = arith.cmpi eq, %9, %15 : vector<8x128xi32>
    %17 = arith.extui %16 : vector<8x128xi1> to vector<8x128xi32>
    %18 = arith.sitofp %17 : vector<8x128xi32> to vector<8x128xf32>
    %cst_7 = arith.constant 3.000000e+01 : f32
    %19 = vector.broadcast %cst_7 : f32 to vector<8x128xf32>
    %20 = arith.mulf %19, %13 : vector<8x128xf32>
    %cst_8 = arith.constant 1.200000e+01 : f32
    %21 = vector.broadcast %cst_8 : f32 to vector<8x128xf32>
    %22 = arith.mulf %21, %18 : vector<8x128xf32>
    %23 = arith.subf %20, %22 : vector<8x128xf32>
    %cst_9 = arith.constant dense<0xFF800000> : vector<8xf32>
    %24 = vector.multi_reduction <maximumf>, %13, %cst_9 [1] : vector<8x128xf32> to vector<8xf32>
    %25 = vector.shape_cast %24 : vector<8xf32> to vector<8x1xf32>
    %c0_10 = arith.constant 0 : index
    %c0_11 = arith.constant 0 : index
    %26 = vector.load %arg8[%c0_10, %c0_11] : memref<8x1xf32, #tpu.memory_space<vmem>>, vector<8x1xf32>
    %27 = arith.maximumf %26, %25 : vector<8x1xf32>
    %28 = arith.subf %26, %27 : vector<8x1xf32>
    %cst_12 = arith.constant 3.000000e+01 : f32
    %29 = vector.broadcast %cst_12 : f32 to vector<8x1xf32>
    %30 = arith.mulf %29, %28 : vector<8x1xf32>
    %31 = math.exp %30 : vector<8x1xf32>
    %c0_13 = arith.constant 0 : index
    %c0_14 = arith.constant 0 : index
    %32 = vector.load %arg9[%c0_13, %c0_14] : memref<8x1xf32, #tpu.memory_space<vmem>>, vector<8x1xf32>
    %33 = arith.mulf %32, %31 : vector<8x1xf32>
    %cst_15 = arith.constant 3.000000e+01 : f32
    %34 = vector.broadcast %cst_15 : f32 to vector<8x1xf32>
    %35 = arith.mulf %34, %27 : vector<8x1xf32>
    %36 = vector.broadcast %35 : vector<8x1xf32> to vector<8x128xf32>
    %37 = arith.subf %23, %36 : vector<8x128xf32>
    %38 = math.exp %37 : vector<8x128xf32>
    %cst_16 = arith.constant dense<0.000000e+00> : vector<8xf32>
    %39 = vector.multi_reduction <add>, %38, %cst_16 [1] : vector<8x128xf32> to vector<8xf32>
    %40 = vector.shape_cast %39 : vector<8xf32> to vector<8x1xf32>
    %41 = arith.addf %33, %40 : vector<8x1xf32>
    %c0_17 = arith.constant 0 : index
    %c0_18 = arith.constant 0 : index
    %42 = vector.load %arg9[%c0_17, %c0_18] : memref<8x1xf32, #tpu.memory_space<vmem>>, vector<8x1xf32>
    tpu.vector_store %arg9[%c0_17, %c0_18], %41 {strides = array<i32>} : memref<8x1xf32, #tpu.memory_space<vmem>>, vector<8x1xf32>,
    %c0_19 = arith.constant 0 : index
    %c0_20 = arith.constant 0 : index
    %43 = vector.load %arg8[%c0_19, %c0_20] : memref<8x1xf32, #tpu.memory_space<vmem>>, vector<8x1xf32>
    tpu.vector_store %arg8[%c0_19, %c0_20], %27 {strides = array<i32>} : memref<8x1xf32, #tpu.memory_space<vmem>>, vector<8x1xf32>,
    %c0_21 = arith.constant 0 : index
    %c0_22 = arith.constant 0 : index
    %44 = vector.load %arg10[%c0_21, %c0_22] : memref<8x1xf32, #tpu.memory_space<vmem>>, vector<8x1xf32>
    %45 = arith.mulf %13, %18 : vector<8x128xf32>
    %cst_23 = arith.constant dense<0.000000e+00> : vector<8xf32>
    %46 = vector.multi_reduction <add>, %45, %cst_23 [1] : vector<8x128xf32> to vector<8xf32>
    %47 = vector.shape_cast %46 : vector<8xf32> to vector<8x1xf32>
    %48 = arith.addf %44, %47 : vector<8x1xf32>
    %c0_24 = arith.constant 0 : index
    %c0_25 = arith.constant 0 : index
    %49 = vector.load %arg10[%c0_24, %c0_25] : memref<8x1xf32, #tpu.memory_space<vmem>>, vector<8x1xf32>
    tpu.vector_store %arg10[%c0_24, %c0_25], %48 {strides = array<i32>} : memref<8x1xf32, #tpu.memory_space<vmem>>, vector<8x1xf32>,
    %c1_i32 = arith.constant 1 : i32
    %50 = arith.cmpi eq, %arg1, %c1_i32 : i32
    %51 = arith.extui %50 : i1 to i32
    %c0_i32_26 = arith.constant 0 : i32
    %52 = arith.cmpi ne, %51, %c0_i32_26 : i32
    scf.if %52 {
      %c0_27 = arith.constant 0 : index
      %c0_28 = arith.constant 0 : index
      %53 = vector.load %arg8[%c0_27, %c0_28] : memref<8x1xf32, #tpu.memory_space<vmem>>, vector<8x1xf32>
      %cst_29 = arith.constant 3.000000e+01 : f32
      %54 = vector.broadcast %cst_29 : f32 to vector<8x1xf32>
      %55 = arith.mulf %54, %53 : vector<8x1xf32>
      %c0_30 = arith.constant 0 : index
      %c0_31 = arith.constant 0 : index
      %56 = vector.load %arg9[%c0_30, %c0_31] : memref<8x1xf32, #tpu.memory_space<vmem>>, vector<8x1xf32>
      %57 = math.log %56 : vector<8x1xf32>
      %58 = arith.addf %55, %57 : vector<8x1xf32>
      %c0_32 = arith.constant 0 : index
      %c0_33 = arith.constant 0 : index
      %59 = vector.load %arg10[%c0_32, %c0_33] : memref<8x1xf32, #tpu.memory_space<vmem>>, vector<8x1xf32>
      %cst_34 = arith.constant 4.000000e-01 : f32
      %60 = vector.broadcast %cst_34 : f32 to vector<8x1xf32>
      %61 = arith.subf %59, %60 : vector<8x1xf32>
      %cst_35 = arith.constant 3.000000e+01 : f32
      %62 = vector.broadcast %cst_35 : f32 to vector<8x1xf32>
      %63 = arith.mulf %62, %61 : vector<8x1xf32>
      %64 = arith.subf %58, %63 : vector<8x1xf32>
      %c0_36 = arith.constant 0 : index
      %c0_37 = arith.constant 0 : index
      %65 = vector.load %arg5[%c0_36, %c0_37] : memref<8x1xf32, #tpu.memory_space<vmem>>, vector<8x1xf32>
      tpu.vector_store %arg5[%c0_36, %c0_37], %64 {strides = array<i32>} : memref<8x1xf32, #tpu.memory_space<vmem>>, vector<8x1xf32>,
      %66 = arith.cmpf oge, %59, %53 : vector<8x1xf32>
      %67 = arith.extui %66 : vector<8x1xi1> to vector<8x1xi32>
      %68 = arith.sitofp %67 : vector<8x1xi32> to vector<8x1xf32>
      %c0_38 = arith.constant 0 : index
      %c0_39 = arith.constant 0 : index
      %69 = vector.load %arg6[%c0_38, %c0_39] : memref<8x1xf32, #tpu.memory_space<vmem>>, vector<8x1xf32>
      tpu.vector_store %arg6[%c0_38, %c0_39], %68 {strides = array<i32>} : memref<8x1xf32, #tpu.memory_space<vmem>>, vector<8x1xf32>,
    } else {
    }
    return
  }
  func.func @transform_0(%arg0: i32, %arg1: i32) -> (i32, i32) {
    %c0_i32 = arith.constant 0 : i32
    %c0_i32_0 = arith.constant 0 : i32
    return %arg0, %c0_i32 : i32, i32
  }
  func.func @transform_1(%arg0: i32, %arg1: i32) -> (i32, i32) {
    %c0_i32 = arith.constant 0 : i32
    %c0_i32_0 = arith.constant 0 : i32
    return %arg1, %c0_i32 : i32, i32
  }
  func.func @transform_2(%arg0: i32, %arg1: i32) -> (i32, i32) {
    %c0_i32 = arith.constant 0 : i32
    %c0_i32_0 = arith.constant 0 : i32
    return %arg0, %c0_i32 : i32, i32
  }
  func.func @transform_3(%arg0: i32, %arg1: i32) -> (i32, i32) {
    %c0_i32 = arith.constant 0 : i32
    %c0_i32_0 = arith.constant 0 : i32
    return %arg0, %c0_i32 : i32, i32
  }
  func.func @transform_4(%arg0: i32, %arg1: i32) -> (i32, i32) {
    %c0_i32 = arith.constant 0 : i32
    %c0_i32_0 = arith.constant 0 : i32
    return %arg0, %c0_i32 : i32, i32
  }
}

</mosaic_0001>

<llo_original>
// kernel: tpu_custom_call.1
$region0: #{tpu_custom_call.1}
  #allocation0 [shape = 'u32[]', space=smem, size = 0x4, offset = 0x4, fixed_abs, tag = 'smem constant byte address 0x4 - core index']
  #allocation1 [shape = 'u32[144,128]{1,0:T(1,128)}', space=vmem, size = 0x12000, scoped, tag = 'internal scratch']
  #allocation2 [shape = 'bf16[8,128]{1,0:T(8,128)(2,1)}', space=vmem, size = 0x800, scoped, tag = 'scratch operand']
  #allocation3 [shape = 'f32[8,1]{1,0:T(8,128)}', space=vmem, size = 0x1000, scoped, tag = 'scratch operand']
  #allocation4 [shape = 'f32[8,1]{1,0:T(8,128)}', space=vmem, size = 0x1000, scoped, tag = 'scratch operand']
  #allocation5 [shape = 'f32[8,1]{1,0:T(8,128)}', space=vmem, size = 0x1000, scoped, tag = 'scratch operand']
  %s0 = inlined_call_operand.vmem [shape: f32[16,128], index: 0, kind: input, shape index: {}]
  %s1 = inlined_call_operand.hbm [shape: bf16[256,128], index: 1, kind: input, shape index: {}]
  %s2 = inlined_call_operand.vmem [shape: s32[16,1], index: 2, kind: input, shape index: {}]
  %s3 = inlined_call_operand.vmem [shape: f32[16,1], index: 3, kind: output, shape index: {0}]
  %s4 = inlined_call_operand.vmem [shape: f32[16,1], index: 4, kind: output, shape index: {1}]
  %5 = xla_tuple %s3, %s4
  %s6 = sld [smem:[#allocation0]]
  $region65: #{tpu_custom_call.1} parent=0
    _
  %s8 = ssub.s32 1, %s6
  %s9 = scalar_select 0, %s8, %s6
  $region1: #{tpu_custom_call.1} parent=0
    #allocation6 [shape = 'u8[65536]{0}', space=vmem, size = 0x10000, scoped, tag = 'input window, operand 1']
    #allocation7 [shape = 's32[2]{0}', space=sflag, size = 0x8, scoped, tag = 'scoped memory for tpu_custom_call.1']
    %10 = vsyncpa [#allocation7], 0
    %s11 = scalar_lea.sflag [#allocation7], 1
    %12 = vsyncpa %s11, 0
    loop: start=0, step=1, limit=6
    $region2: #{tpu_custom_call.1} parent=1 // loop_pre_header
      _
    $region3: #{tpu_custom_call.1} parent=1 // loop_header
      %s14 = sphi 0, %s18
      %p15 = scmp.ge.s32.totalorder %s14, 6
      %s21 = sphi 0, %s33
      %s22 = sphi 0, %s29
      %s23 = sphi 0, %s21
      %s24 = sphi 0, %s22
      %s25 = sphi 0, %s23
      %s26 = sphi 0, %s24
      %s36 = sphi 0, %s38
      %s39 = sphi 0, %s36
      %s40 = sphi 0, %s39
      %s56 = sphi 0, %s40
      %s62 = sphi 0, %s64
      %s65 = sphi 0, %s62
      %s66 = sphi 0, %s65
      %s82 = sphi 0, %s66
      %s88 = sphi 0, %s90
      %s91 = sphi 0, %s88
      %s92 = sphi 0, %s91
      %s108 = sphi 0, %s92
      %s114 = sphi 0, %s116
      %s117 = sphi 0, %s114
      %s118 = sphi 0, %s117
      %s134 = sphi 0, %s118
      %s140 = sphi 0, %s142
      %s143 = sphi 0, %s140
      %s144 = sphi 0, %s143
      %s160 = sphi 0, %s144
    $region4: #{tpu_custom_call.1} parent=1 // loop_header_branch
      %17 = sbr.rel (%p15) target = $region8
    $region5: #{tpu_custom_call.1} parent=1 // loop_body
      %s19 = ssub.s32 %s14, 1
      %s20 = ssub.s32 %s14, 2
      %s27 = sadd.s32 1, %s22
      %p28 = scmp.ge.s32.totalorder %s27, 2
      %s29 = scalar_select %p28, 0, %s27
      %s30 = sadd.s32 1, %s21
      %s31 = scalar_select %p28, %s30, %s21
      %p32 = scmp.ge.s32.totalorder %s31, 2
      %s33 = scalar_select %p32, 0, %s31
      %s34 = ssub.s32 %s21, %s33
      %p35 = scmp.eq.s32.totalorder %s34, 0
      %s37 = sadd.s32 %s36, 1
      %s38 = scalar_select %p35, %s36, %s37
      %p41 = pneg %p35
      %p42 = scmp.eq.s32.totalorder %s14, 3
      %p43 = por %p41, %p42
      %p44 = scmp.ne.s32.totalorder %s36, %s39
      %p45 = scmp.eq.s32.totalorder %s14, 0
      %p46 = por %p44, %p45
      %p47 = scmp.ne.s32.totalorder %s36, %s39
      %p48 = scmp.eq.s32.totalorder %s19, 3
      %p49 = por %p47, %p48
      %p50 = scmp.ne.s32.totalorder %s39, %s40
      %p51 = scmp.eq.s32.totalorder %s19, 0
      %p52 = por %p50, %p51
      %p53 = scmp.ne.s32.totalorder %s39, %s40
      %p54 = scmp.eq.s32.totalorder %s20, 3
      %p55 = por %p53, %p54
      %p57 = scmp.ne.s32.totalorder %s40, %s56
      %p58 = scmp.eq.s32.totalorder %s20, 0
      %p59 = por %p57, %p58
      %s60 = ssub.s32 %s22, %s29
      %p61 = scmp.eq.s32.totalorder %s60, 0
      %s63 = sadd.s32 %s62, 1
      %s64 = scalar_select %p61, %s62, %s63
      %p67 = pneg %p61
      %p68 = scmp.eq.s32.totalorder %s14, 3
      %p69 = por %p67, %p68
      %p70 = scmp.ne.s32.totalorder %s62, %s65
      %p71 = scmp.eq.s32.totalorder %s14, 0
      %p72 = por %p70, %p71
      %p73 = scmp.ne.s32.totalorder %s62, %s65
      %p74 = scmp.eq.s32.totalorder %s19, 3
      %p75 = por %p73, %p74
      %p76 = scmp.ne.s32.totalorder %s65, %s66
      %p77 = scmp.eq.s32.totalorder %s19, 0
      %p78 = por %p76, %p77
      %p79 = scmp.ne.s32.totalorder %s65, %s66
      %p80 = scmp.eq.s32.totalorder %s20, 3
      %p81 = por %p79, %p80
      %p83 = scmp.ne.s32.totalorder %s66, %s82
      %p84 = scmp.eq.s32.totalorder %s20, 0
      %p85 = por %p83, %p84
      %s86 = ssub.s32 %s21, %s33
      %p87 = scmp.eq.s32.totalorder %s86, 0
      %s89 = sadd.s32 %s88, 1
      %s90 = scalar_select %p87, %s88, %s89
      %p93 = pneg %p87
      %p94 = scmp.eq.s32.totalorder %s14, 3
      %p95 = por %p93, %p94
      %p96 = scmp.ne.s32.totalorder %s88, %s91
      %p97 = scmp.eq.s32.totalorder %s14, 0
      %p98 = por %p96, %p97
      %p99 = scmp.ne.s32.totalorder %s88, %s91
      %p100 = scmp.eq.s32.totalorder %s19, 3
      %p101 = por %p99, %p100
      %p102 = scmp.ne.s32.totalorder %s91, %s92
      %p103 = scmp.eq.s32.totalorder %s19, 0
      %p104 = por %p102, %p103
      %p105 = scmp.ne.s32.totalorder %s91, %s92
      %p106 = scmp.eq.s32.totalorder %s20, 3
      %p107 = por %p105, %p106
      %p109 = scmp.ne.s32.totalorder %s92, %s108
      %p110 = scmp.eq.s32.totalorder %s20, 0
      %p111 = por %p109, %p110
      %s112 = ssub.s32 %s21, %s33
      %p113 = scmp.eq.s32.totalorder %s112, 0
      %s115 = sadd.s32 %s114, 1
      %s116 = scalar_select %p113, %s114, %s115
      %p119 = pneg %p113
      %p120 = scmp.eq.s32.totalorder %s14, 3
      %p121 = por %p119, %p120
      %p122 = scmp.ne.s32.totalorder %s114, %s117
      %p123 = scmp.eq.s32.totalorder %s14, 0
      %p124 = por %p122, %p123
      %p125 = scmp.ne.s32.totalorder %s114, %s117
      %p126 = scmp.eq.s32.totalorder %s19, 3
      %p127 = por %p125, %p126
      %p128 = scmp.ne.s32.totalorder %s117, %s118
      %p129 = scmp.eq.s32.totalorder %s19, 0
      %p130 = por %p128, %p129
      %p131 = scmp.ne.s32.totalorder %s117, %s118
      %p132 = scmp.eq.s32.totalorder %s20, 3
      %p133 = por %p131, %p132
      %p135 = scmp.ne.s32.totalorder %s118, %s134
      %p136 = scmp.eq.s32.totalorder %s20, 0
      %p137 = por %p135, %p136
      %s138 = ssub.s32 %s21, %s33
      %p139 = scmp.eq.s32.totalorder %s138, 0
      %s141 = sadd.s32 %s140, 1
      %s142 = scalar_select %p139, %s140, %s141
      %p145 = pneg %p139
      %p146 = scmp.eq.s32.totalorder %s14, 3
      %p147 = por %p145, %p146
      %p148 = scmp.ne.s32.totalorder %s140, %s143
      %p149 = scmp.eq.s32.totalorder %s14, 0
      %p150 = por %p148, %p149
      %p151 = scmp.ne.s32.totalorder %s140, %s143
      %p152 = scmp.eq.s32.totalorder %s19, 3
      %p153 = por %p151, %p152
      %p154 = scmp.ne.s32.totalorder %s143, %s144
      %p155 = scmp.eq.s32.totalorder %s19, 0
      %p156 = por %p154, %p155
      %p157 = scmp.ne.s32.totalorder %s143, %s144
      %p158 = scmp.eq.s32.totalorder %s20, 3
      %p159 = por %p157, %p158
      %p161 = scmp.ne.s32.totalorder %s144, %s160
      %p162 = scmp.eq.s32.totalorder %s20, 0
      %p163 = por %p161, %p162
      %p164 = scmp.le.s32.totalorder 1, %s14
      %p165 = scmp.lt.s32.totalorder %s14, 5
      %p166 = pnand %p164, %p165
      %p167 = pneg %p166
      // Predicated region
      $region9: #{tpu_custom_call.1} parent=5 // pred_check
        _
      $region10: #{tpu_custom_call.1} parent=5 // pred_check_branch
        %169 = sbr.rel (%p166) target = $region12
      $region11: #{tpu_custom_call.1} parent=5 // pred_region
        %s170 = ssub.s32 %s14, 1
      $region12: #{tpu_custom_call.1} parent=5 // pred_fallthru
        _
      %p171 = scmp.lt.s32.totalorder %s14, 4
      // Predicated region
      $region13: #{tpu_custom_call.1} parent=5 // pred_check
        %p172 = pneg %p171
      $region14: #{tpu_custom_call.1} parent=5 // pred_check_branch
        %174 = sbr.rel (%p172) target = $region16
      $region15: #{tpu_custom_call.1} parent=5 // pred_region
        // Predicated region
        $region17: #{tpu_custom_call.1} parent=15 // pred_check
          %p175 = pneg %p46
        $region18: #{tpu_custom_call.1} parent=15 // pred_check_branch
          %177 = sbr.rel (%p175) target = $region20
        $region19: #{tpu_custom_call.1} parent=15 // pred_region
          %p178 = scmp.lt.s32.totalorder %s21, 1
          %s179 = scalar_select %p178, %s21, 1
          %s180 = smul.addr %s179, 8
          %s181 = scalar_lea.vmem %s0, %s180
        $region20: #{tpu_custom_call.1} parent=15 // pred_fallthru
          _
        // Predicated region
        $region21: #{tpu_custom_call.1} parent=15 // pred_check
          %p182 = pneg %p72
        $region22: #{tpu_custom_call.1} parent=15 // pred_check_branch
          %184 = sbr.rel (%p182) target = $region24
        $region23: #{tpu_custom_call.1} parent=15 // pred_region
          %s185 = sand.u32 %s62, 1
          %s186 = scalar_lea.sflag [#allocation7], %s185
          %s187 = sand.u32 %s62, 1
          %s188 = smul.addr %s187, 64
          %s189 = scalar_lea.vmem [#allocation6], %s188
          %s190 = smul.u32 16, %s22
          %s192 = ssub.s32 1024, 1024
          %193 = vsyncadd %s186, %s192
          %s194 = smul.addr %s190, 64
          %s195 = scalar_lea.hbm %s1, %s194
          %s196 = sshll.u32 %s189, 4
          %s197 = int_to_ptr.vmem [resolvable:$true] %s196
          %202 = dma.hbm_to_vmem [thread:$0]  %s195, 1024, %s197, %s186, 64, 64, 4
        $region24: #{tpu_custom_call.1} parent=15 // pred_fallthru
          _
        // Predicated region
        $region25: #{tpu_custom_call.1} parent=15 // pred_check
          %p203 = pneg %p98
        $region26: #{tpu_custom_call.1} parent=15 // pred_check_branch
          %205 = sbr.rel (%p203) target = $region28
        $region27: #{tpu_custom_call.1} parent=15 // pred_region
          %p206 = scmp.lt.s32.totalorder %s21, 1
          %s207 = scalar_select %p206, %s21, 1
          %s208 = smul.addr %s207, 8
          %s209 = scalar_lea.vmem %s2, %s208
        $region28: #{tpu_custom_call.1} parent=15 // pred_fallthru
          _
      $region16: #{tpu_custom_call.1} parent=5 // pred_fallthru
        _
      %p210 = scmp.le.s32.totalorder 1, %s14
      %p211 = scmp.lt.s32.totalorder %s14, 5
      %p212 = pnand %p210, %p211
      %p213 = pneg %p212
      // Predicated region
      $region29: #{tpu_custom_call.1} parent=5 // pred_check
        _
      $region30: #{tpu_custom_call.1} parent=5 // pred_check_branch
        %215 = sbr.rel (%p212) target = $region32
      $region31: #{tpu_custom_call.1} parent=5 // pred_region
        %s216 = ssub.s32 %s14, 1
        %s217 = sand.u32 %s65, 1
        %s218 = scalar_lea.sflag [#allocation7], %s217
        %s219 = sand.u32 %s65, 1
        %s220 = smul.addr %s219, 64
        %s221 = scalar_lea.vmem [#allocation6], %s220
        // Predicated region
        $region33: #{tpu_custom_call.1} parent=31 // pred_check
          %p222 = pneg %p78
        $region34: #{tpu_custom_call.1} parent=31 // pred_check_branch
          %224 = sbr.rel (%p222) target = $region36
        $region35: #{tpu_custom_call.1} parent=31 // pred_region
          %225 = dma.done %s218, 1024
        $region36: #{tpu_custom_call.1} parent=31 // pred_fallthru
          _
        %p226 = scmp.lt.s32.totalorder %s23, 1
        %s227 = scalar_select %p226, %s23, 1
        %s228 = smul.addr %s227, 8
        %s229 = scalar_lea.vmem %s0, %s228
        %p230 = pneg %p52
        %p231 = pneg %p49
        %s232 = sand.u32 %s65, 1
        %s233 = scalar_lea.sflag [#allocation7], %s232
        %s234 = sand.u32 %s65, 1
        %s235 = smul.addr %s234, 64
        %s236 = scalar_lea.vmem [#allocation6], %s235
        %p237 = pneg %p78
        %p238 = pneg %p75
        %p239 = scmp.lt.s32.totalorder %s23, 1
        %s240 = scalar_select %p239, %s23, 1
        %s241 = smul.addr %s240, 8
        %s242 = scalar_lea.vmem %s2, %s241
        %p243 = pneg %p104
        %p244 = pneg %p101
        %p245 = pneg %p130
        %p246 = pneg %p127
        %p247 = scmp.lt.s32.totalorder %s23, 1
        %s248 = scalar_select %p247, %s23, 1
        %s249 = smul.addr %s248, 8
        %s250 = scalar_lea.vmem %s3, %s249
        %p251 = pneg %p156
        %p252 = pneg %p153
        %p253 = scmp.lt.s32.totalorder %s23, 1
        %s254 = scalar_select %p253, %s23, 1
        %s255 = smul.addr %s254, 8
        %s256 = scalar_lea.vmem %s4, %s255
        %p257 = scmp.lt.s32.totalorder %s23, 1
        %s258 = scalar_select %p257, %s23, 1
        %s259 = smul.addr %s258, 8
        %s260 = scalar_lea.vmem %s0, %s259
        %s261 = smul.u32 16, %s24
        %p262 = scmp.lt.s32.totalorder %s23, 1
        %s263 = scalar_select %p262, %s23, 1
        %s264 = smul.addr %s263, 8
        %s265 = scalar_lea.vmem %s2, %s264
        %p266 = scmp.lt.s32.totalorder %s23, 1
        %s267 = scalar_select %p266, %s23, 1
        %s268 = smul.addr %s267, 8
        %s269 = scalar_lea.vmem %s3, %s268
        %p270 = scmp.lt.s32.totalorder %s23, 1
        %s271 = scalar_select %p270, %s23, 1
        %s272 = smul.addr %s271, 8
        %s273 = scalar_lea.vmem %s4, %s272
        %p275 = scmp.eq.s32.totalorder %s24, 0
        // Predicated region
        $region37: #{tpu_custom_call.1} parent=31 // pred_check
          %p276 = pneg %p275
        $region38: #{tpu_custom_call.1} parent=31 // pred_check_branch
          %278 = sbr.rel (%p276) target = $region40
        $region39: #{tpu_custom_call.1} parent=31 // pred_region
          %v279 = vld [vmem:[%s260] sm:$0xff]
          %v280 = vmul.f32 %v279, %v279
          %281 = vadd.xlane.f32.xlu0 %v280
          %v282 = vpop.xlane.xlu0 %281
          %v283 = vmax.f32 %v282, 1e-24
          %v284 = vrsqrt.pop %v283
          %v285 = vmul.f32 %v279, %v284
          %v286 = vpack.c.bf16 %v285, %v285
          %287 = vst [vmem:[#allocation2] sm:$0xf] %v286
          %vm288 = vcmask 7168
          %289 = vst.msk [vmem:[#allocation3] sm:$0xff] %vm288, -1e+30
          %290 = vst.msk [vmem:[#allocation4] sm:$0xff] %vm288, 0.0
          %291 = vst.msk [vmem:[#allocation5] sm:$0xff] %vm288, 0.0
        $region40: #{tpu_custom_call.1} parent=31 // pred_fallthru
          _
        %v292 = vld [vmem:[#allocation2] sm:$0xf]
        %v293 = vld [vmem:[%s221] sm:$0xf]
        %v294 = vld [vmem:[%s221 + $0x4] sm:$0xf]
        %v295 = vld [vmem:[%s221 + $0x8] sm:$0xf]
        %v296 = vld [vmem:[%s221 + $0xc] sm:$0xf]
        %v297 = vld [vmem:[%s221 + $0x10] sm:$0xf]
        %v298 = vld [vmem:[%s221 + $0x14] sm:$0xf]
        %v299 = vld [vmem:[%s221 + $0x18] sm:$0xf]
        %v300 = vld [vmem:[%s221 + $0x1c] sm:$0xf]
        %v301 = vld [vmem:[%s221 + $0x20] sm:$0xf]
        %v302 = vld [vmem:[%s221 + $0x24] sm:$0xf]
        %v303 = vld [vmem:[%s221 + $0x28] sm:$0xf]
        %v304 = vld [vmem:[%s221 + $0x2c] sm:$0xf]
        %v305 = vld [vmem:[%s221 + $0x30] sm:$0xf]
        %v306 = vld [vmem:[%s221 + $0x34] sm:$0xf]
        %v307 = vld [vmem:[%s221 + $0x38] sm:$0xf]
        %v308 = vld [vmem:[%s221 + $0x3c] sm:$0xf]
        %v325 = vunpack.c.l.b16 %v293
        %v326 = vunpack.c.l.b16 %v294
        %v327 = vunpack.c.l.b16 %v295
        %v328 = vunpack.c.l.b16 %v296
        %v329 = vunpack.c.l.b16 %v297
        %v330 = vunpack.c.l.b16 %v298
        %v331 = vunpack.c.l.b16 %v299
        %v332 = vunpack.c.l.b16 %v300
        %v333 = vunpack.c.l.b16 %v301
        %v334 = vunpack.c.l.b16 %v302
        %v335 = vunpack.c.l.b16 %v303
        %v336 = vunpack.c.l.b16 %v304
        %v337 = vunpack.c.l.b16 %v305
        %v338 = vunpack.c.l.b16 %v306
        %v339 = vunpack.c.l.b16 %v307
        %v340 = vunpack.c.l.b16 %v308
        %v341 = vpack.c.b16 %v326, %v325
        %v342 = vpack.c.b16 %v328, %v327
        %v343 = vpack.c.b16 %v330, %v329
        %v344 = vpack.c.b16 %v332, %v331
        %v345 = vpack.c.b16 %v334, %v333
        %v346 = vpack.c.b16 %v336, %v335
        %v347 = vpack.c.b16 %v338, %v337
        %v348 = vpack.c.b16 %v340, %v339
        %357 = vmatprep.subr.bf16.mxu0 0
        %358 = vmatpush1.bf16.xpose.msra.mxu0 %v341
        %359 = vmatprep.subr.bf16.mxu0 0
        %360 = vmatpush1.bf16.xpose.msra.mxu0 %v342
        %361 = vmatprep.subr.bf16.mxu0 0
        %362 = vmatpush1.bf16.xpose.msra.mxu0 %v343
        %363 = vmatprep.subr.bf16.mxu0 0
        %364 = vmatpush1.bf16.xpose.msra.mxu0 %v344
        %365 = vmatprep.subr.bf16.mxu0 0
        %366 = vmatpush1.bf16.xpose.msra.mxu0 %v345
        %367 = vmatprep.subr.bf16.mxu0 0
        %368 = vmatpush1.bf16.xpose.msra.mxu0 %v346
        %369 = vmatprep.subr.bf16.mxu0 0
        %370 = vmatpush1.bf16.xpose.msra.mxu0 %v347
        %371 = vmatprep.subr.bf16.mxu0 0
        %372 = vmatpush1.bf16.xpose.msra.mxu0 %v348
        %373 = vmatprep.subr.bf16.mxu0 0
        %374 = vmatpush1.bf16.xpose.msra.mxu0 0
        %375 = vmatprep.subr.bf16.mxu0 0
        %376 = vmatpush1.bf16.xpose.msra.mxu0 0
        %377 = vmatprep.subr.bf16.mxu0 0
        %378 = vmatpush1.bf16.xpose.msra.mxu0 0
        %379 = vmatprep.subr.bf16.mxu0 0
        %380 = vmatpush1.bf16.xpose.msra.mxu0 0
        %381 = vmatprep.subr.bf16.mxu0 0
        %382 = vmatpush1.bf16.xpose.msra.mxu0 0
        %383 = vmatprep.subr.bf16.mxu0 0
        %384 = vmatpush1.bf16.xpose.msra.mxu0 0
        %385 = vmatprep.subr.bf16.mxu0 0
        %386 = vmatpush1.bf16.xpose.msra.mxu0 0
        %387 = vmatprep.subr.bf16.mxu0 0
        %388 = vmatpush1.bf16.xpose.msra.mxu0 0
        %389 = vmatprep.mubr.bf16.mxu0 0
        %390 = vmatmul.mubr.bf16.gmra.mrb[0].mxu0 %v292
        %v391 = vpop.f32.mrb[0].mxu0
        %v392 = vadd.f32 0.0, %v391
        %v393 = vpop.f32.mrb[0].mxu0
        %v394 = vpop.f32.mrb[0].mxu0
        %v395 = vpop.f32.mrb[0].mxu0
        %396 = vdwg.mxu0
        %s397 = smul.u32 %s24, 128
        %v398 = vlaneseq
        %v399 = vand.u32 %v398, 127
        %v400 = vstv %s397
        %v401 = vadd.s32 %v400, %v399
        %vm402 = vcmp.lt.s32.totalorder %v401, 200
        %v403 = vsel %vm402, %v392, -1e+30
        %v404 = vld [vmem:[%s265] sm:$0xff]
        %405 = vset.pattern.permute.xlu0 0
        %406 = vperm.xlu0 %405, %v404
        %v407 = vpop.permute.xlu0 %406
        %vm408 = vcmp.eq.s32.totalorder %v401, %v407
        %v409 = vsel %vm408, 1, 0
        %v410 = vcvt.s32.f32 %v409
        %v411 = vmul.f32 %v403, 30.0
        %v412 = vmul.f32 %v410, 12.0
        %v413 = vsub.f32 %v411, %v412
        %414 = vmax.xlane.f32.xlu0 %v403
        %v415 = vpop.xlane.xlu0 %414
        %v416 = vld [vmem:[#allocation3] sm:$0xff]
        %v417 = vmax.f32 %v416, %v415
        %v418 = vsub.f32 %v416, %v417
        %v419 = vmul.f32 %v418, 30.0
        %v420 = vmul.f32 %v419, 1.442695
        %v421 = vpow.pop %v420
        %v422 = vld [vmem:[#allocation4] sm:$0xff]
        %v423 = vmul.f32 %v422, %v421
        %v424 = vmul.f32 %v417, 30.0
        %426 = vset.pattern.permute.xlu0 0
        %427 = vperm.xlu0 %426, %v424
        %v428 = vpop.permute.xlu0 %427
        %v430 = vsub.f32 %v413, %v428
        %v431 = vmul.f32 %v430, 1.442695
        %v432 = vpow.pop %v431
        %433 = vadd.xlane.f32.xlu0 %v432
        %v434 = vpop.xlane.xlu0 %433
        %v435 = vadd.f32 %v423, %v434
        %vm436 = vcmask 7168
        %437 = vst.msk [vmem:[#allocation4] sm:$0xff] %vm436, %v435
        %438 = vst.msk [vmem:[#allocation3] sm:$0xff] %vm436, %v417
        %v439 = vld [vmem:[#allocation5] sm:$0xff]
        %v440 = vmul.f32 %v403, %v410
        %441 = vadd.xlane.f32.xlu0 %v440
        %v442 = vpop.xlane.xlu0 %441
        %v443 = vadd.f32 %v439, %v442
        %444 = vst.msk [vmem:[#allocation5] sm:$0xff] %vm436, %v443
        %p445 = scmp.eq.s32.totalorder %s24, 1
        // Predicated region
        $region41: #{tpu_custom_call.1} parent=31 // pred_check
          %p446 = pneg %p445
        $region42: #{tpu_custom_call.1} parent=31 // pred_check_branch
          %448 = sbr.rel (%p446) target = $region44
        $region43: #{tpu_custom_call.1} parent=31 // pred_region
          %v449 = vld [vmem:[#allocation3] sm:$0xff]
          %v450 = vmul.f32 %v449, 30.0
          %v451 = vld [vmem:[#allocation4] sm:$0xff]
          %v452 = vlog2.pop %v451
          %v453 = vmul.f32 %v452, 0.6931472
          %v454 = vadd.f32 %v450, %v453
          %v455 = vld [vmem:[#allocation5] sm:$0xff]
          %v456 = vsub.f32 %v455, 0.4
          %v457 = vmul.f32 %v456, 30.0
          %v458 = vsub.f32 %v454, %v457
          %459 = vst.msk [vmem:[%s269] sm:$0xff] %vm436, %v458
          %vm460 = vcmp.ge.f32.partialorder %v455, %v449
          %v461 = vsel %vm460, 1, 0
          %v462 = vcvt.s32.f32 %v461
          %463 = vst.msk [vmem:[%s273] sm:$0xff] %vm436, %v462
        $region44: #{tpu_custom_call.1} parent=31 // pred_fallthru
          _
        %p464 = scmp.lt.s32.totalorder %s23, 1
        %s465 = scalar_select %p464, %s23, 1
        %s466 = smul.addr %s465, 8
        %s467 = scalar_lea.vmem %s3, %s466
        %p468 = scmp.lt.s32.totalorder %s23, 1
        %s469 = scalar_select %p468, %s23, 1
        %s470 = smul.addr %s469, 8
        %s471 = scalar_lea.vmem %s4, %s470
        // Predicated region
        $region45: #{tpu_custom_call.1} parent=31 // pred_check
          %p472 = pneg %p127
        $region46: #{tpu_custom_call.1} parent=31 // pred_check_branch
          %474 = sbr.rel (%p472) target = $region48
        $region47: #{tpu_custom_call.1} parent=31 // pred_region
          _
        $region48: #{tpu_custom_call.1} parent=31 // pred_fallthru
          _
        // Predicated region
        $region49: #{tpu_custom_call.1} parent=31 // pred_check
          %p475 = pneg %p153
        $region50: #{tpu_custom_call.1} parent=31 // pred_check_branch
          %477 = sbr.rel (%p475) target = $region52
        $region51: #{tpu_custom_call.1} parent=31 // pred_region
          _
        $region52: #{tpu_custom_call.1} parent=31 // pred_fallthru
          _
      $region32: #{tpu_custom_call.1} parent=5 // pred_fallthru
        _
      %p478 = scmp.le.s32.totalorder 2, %s14
      // Predicated region
      $region53: #{tpu_custom_call.1} parent=5 // pred_check
        %p479 = pneg %p478
      $region54: #{tpu_custom_call.1} parent=5 // pred_check_branch
        %481 = sbr.rel (%p479) target = $region56
      $region55: #{tpu_custom_call.1} parent=5 // pred_region
        %s482 = ssub.s32 %s14, 2
        // Predicated region
        $region57: #{tpu_custom_call.1} parent=55 // pred_check
          %p483 = pneg %p133
        $region58: #{tpu_custom_call.1} parent=55 // pred_check_branch
          %485 = sbr.rel (%p483) target = $region60
        $region59: #{tpu_custom_call.1} parent=55 // pred_region
          %p486 = scmp.lt.s32.totalorder %s25, 1
          %s487 = scalar_select %p486, %s25, 1
          %s488 = smul.addr %s487, 8
          %s489 = scalar_lea.vmem %s3, %s488
        $region60: #{tpu_custom_call.1} parent=55 // pred_fallthru
          _
        // Predicated region
        $region61: #{tpu_custom_call.1} parent=55 // pred_check
          %p490 = pneg %p159
        $region62: #{tpu_custom_call.1} parent=55 // pred_check_branch
          %492 = sbr.rel (%p490) target = $region64
        $region63: #{tpu_custom_call.1} parent=55 // pred_region
          %p493 = scmp.lt.s32.totalorder %s25, 1
          %s494 = scalar_select %p493, %s25, 1
          %s495 = smul.addr %s494, 8
          %s496 = scalar_lea.vmem %s4, %s495
        $region64: #{tpu_custom_call.1} parent=55 // pred_fallthru
          _
      $region56: #{tpu_custom_call.1} parent=5 // pred_fallthru
        _
    $region6: #{tpu_custom_call.1} parent=1 // loop_footer
      %s18 = sadd.s32 1, %s14
    $region7: #{tpu_custom_call.1} parent=1 // loop_footer_branch
      %13 = sbr.rel target = $region3
    $region8: #{tpu_custom_call.1} parent=1 // loop_exit
      _
    %497 = vsyncpa [#allocation7], 1
    %s498 = scalar_lea.sflag [#allocation7], 1
    %499 = vsyncpa %s498, 1

</llo_original>
